<compile_context>
chip_gen: v6e
topology: v6e:2x2x1
jax: 0.10.0
libtpu: 0.0.40
codegen_flags: <defaults>
</compile_context>

<pallas_src>
import functools

import jax
import jax.numpy as jnp
from jax.experimental import pallas as pl
from jax.experimental.pallas import tpu as pltpu


def _round_up(x: int, m: int) -> int:
    return ((x + m - 1) // m) * m


def _make_ncf_kernel(n_fc_layers: int):
    """Build the NCF kernel body for a fixed number of fc layers."""

    def kernel(*refs):
        # Unpack: gmf_u, gmf_i, mlp_cat, (W, b) * n_fc, wo_gmf, wo_mlp, bo, out
        gmf_u_ref, gmf_i_ref, mlp_ref = refs[:3]
        idx = 3
        fc_refs = []
        for _ in range(n_fc_layers):
            fc_refs.append((refs[idx], refs[idx + 1]))
            idx += 2
        wo_gmf_ref, wo_mlp_ref, bo_ref = refs[idx], refs[idx + 1], refs[idx + 2]
        out_ref = refs[idx + 3]

        matmul_dtype = fc_refs[0][0].dtype

        # GMF branch: elementwise product of user/item embeddings (f32 VPU).
        x1 = (gmf_u_ref[...].astype(jnp.float32)
              * gmf_i_ref[...].astype(jnp.float32))                 # [TB, E]

        # MLP branch.  cat([mlp_u, mlp_i], 1) already happened in the wrapper,
        # so every layer is a single MXU dot with f32 accumulation.
        h = mlp_ref[...]                                            # [TB, 2E]
        for w_ref, b_ref in fc_refs:
            z = jnp.dot(h, w_ref[...], preferred_element_type=jnp.float32)
            z = z + b_ref[...].astype(jnp.float32)
            h = jnp.maximum(z, 0.0).astype(matmul_dtype)

        # Output layer consumes cat([x1, h], 1).  The [*, 1] matmul is a
        # degenerate MXU shape, so do it as a VPU mul + lane (XLU) reduce
        # against the pre-split, pre-transposed output-weight rows.
        logit = (
            jnp.sum(x1 * wo_gmf_ref[...].astype(jnp.float32),
                    axis=-1, keepdims=True)
            + jnp.sum(h.astype(jnp.float32)
                      * wo_mlp_ref[...].astype(jnp.float32),
                      axis=-1, keepdims=True)
            + bo_ref[...].astype(jnp.float32)
        )                                                           # [TB, 1]
        out_ref[...] = jax.nn.sigmoid(logit)

    return kernel


def init_ncf_params(key, num_users, num_items, layers):
    """Deterministic parameter init matching the module's shapes."""
    embed_dim = layers[0] // 2
    keys = jax.random.split(key, 4 + 2 * len(layers))
    params = {
        "gmf_user_emb": jax.random.normal(keys[0], (num_users, embed_dim),
                                          jnp.float32),
        "gmf_item_emb": jax.random.normal(keys[1], (num_items, embed_dim),
                                          jnp.float32),
        "mlp_user_emb": jax.random.normal(keys[2], (num_users, embed_dim),
                                          jnp.float32),
        "mlp_item_emb": jax.random.normal(keys[3], (num_items, embed_dim),
                                          jnp.float32),
    }
    fc = []
    k = 4
    for in_dim, out_dim in zip(layers[:-1], layers[1:]):
        bound = 1.0 / jnp.sqrt(in_dim)
        # stored as [in, out] (transposed vs. torch's [out, in])
        w = jax.random.uniform(keys[k], (in_dim, out_dim), jnp.float32,
                               -bound, bound)
        b = jax.random.uniform(keys[k + 1], (1, out_dim), jnp.float32,
                               -bound, bound)
        fc.append((w, b))
        k += 2
    params["fc"] = fc

    out_in = embed_dim + layers[-1]
    bound = 1.0 / jnp.sqrt(out_in)
    params["out_w"] = jax.random.uniform(keys[-2], (out_in, 1), jnp.float32,
                                         -bound, bound)
    params["out_b"] = jax.random.uniform(keys[-1], (1, 1), jnp.float32,
                                         -bound, bound)
    return params


@functools.partial(jax.jit, static_argnames=("block_rows", "compute_dtype"))
def ncf_forward(user_input, item_input, params, *,
                block_rows: int = 512, compute_dtype=jnp.float32):
    embed_dim = params["gmf_user_emb"].shape[1]

    # --- glue: embedding gathers (data-dependent row lookups, stays in XLA).
    gmf_u = params["gmf_user_emb"][user_input].astype(compute_dtype)   # [B, E]
    gmf_i = params["gmf_item_emb"][item_input].astype(compute_dtype)   # [B, E]
    # cat([mlp_u, mlp_i], 1) is absorbed into the gather -> single [B, 2E].
    mlp_cat = jnp.concatenate(
        [params["mlp_user_emb"][user_input],
         params["mlp_item_emb"][item_input]], axis=1).astype(compute_dtype)

    B = user_input.shape[0]
    sublane = 8 if compute_dtype == jnp.float32 else 16
    tb = _round_up(min(block_rows, _round_up(B, sublane)), sublane)
    b_pad = _round_up(B, tb)
    pad = b_pad - B
    if pad:
        gmf_u = jnp.pad(gmf_u, ((0, pad), (0, 0)))
        gmf_i = jnp.pad(gmf_i, ((0, pad), (0, 0)))
        mlp_cat = jnp.pad(mlp_cat, ((0, pad), (0, 0)))

    # Weights: cast to the matmul dtype; pre-split / pre-transpose the output
    # layer weight so the kernel never slices a VMEM ref.
    fc = params["fc"]
    n_fc = len(fc)
    weight_ops = []
    for w, b in fc:
        weight_ops += [w.astype(compute_dtype), b.astype(compute_dtype)]
    wo = params["out_w"]
    wo_gmf = wo[:embed_dim, :].T.astype(compute_dtype)                 # [1, E]
    wo_mlp = wo[embed_dim:, :].T.astype(compute_dtype)                 # [1, Hl]
    bo = params["out_b"].astype(jnp.float32)                           # [1, 1]
    weight_ops += [wo_gmf, wo_mlp, bo]

    operands = [gmf_u, gmf_i, mlp_cat] + weight_ops

    def tiled_spec(arr):
        return pl.BlockSpec((tb, arr.shape[1]), lambda i: (i, 0))

    def resident_spec(arr):
        return pl.BlockSpec(arr.shape, lambda i: (0, 0))

    in_specs = [tiled_spec(gmf_u), tiled_spec(gmf_i), tiled_spec(mlp_cat)]
    in_specs += [resident_spec(a) for a in weight_ops]
    out_spec = pl.BlockSpec((tb, 1), lambda i: (i, 0))

    kernel = _make_ncf_kernel(n_fc)

    out = pl.pallas_call(
        kernel,
        out_shape=jax.ShapeDtypeStruct((b_pad, 1), jnp.float32),
        grid=(b_pad // tb,),
        in_specs=in_specs,
        out_specs=out_spec,
        compiler_params=pltpu.CompilerParams(
            dimension_semantics=("parallel",)),
    )(*operands)

    return out[:B]


def ncf_reference(user_input, item_input, params):
    """Pure-JAX reference mirroring the PyTorch forward."""
    gmf_u = params["gmf_user_emb"][user_input]
    gmf_i = params["gmf_item_emb"][item_input]
    x1 = gmf_u * gmf_i
    x2 = jnp.concatenate(
        [params["mlp_user_emb"][user_input],
         params["mlp_item_emb"][item_input]], axis=1)
    for w, b in params["fc"]:
        x2 = jnp.maximum(x2 @ w + b, 0.0)
    x = jnp.concatenate([x1, x2], axis=1)
    logit = x @ params["out_w"] + params["out_b"]
    return jax.nn.sigmoid(logit)


if __name__ == "__main__":
    num_users, num_items = 10, 12
    layers = [32, 16, 8]          # first MLP layer width = 2 * embed_dim
    batch = 8

    key = jax.random.PRNGKey(0)
    kp, ku, ki = jax.random.split(key, 3)
    params = init_ncf_params(kp, num_users, num_items, layers)

    user_input = jax.random.randint(ku, (batch,), 0, num_users, jnp.int32)
    item_input = jax.random.randint(ki, (batch,), 0, num_items, jnp.int32)

    ref = ncf_reference(user_input, item_input, params)

    # f32 path: must match the f32 reference tightly.
    out = ncf_forward(user_input, item_input, params)
    out = jax.block_until_ready(out)
    assert out.shape == (batch, 1)
    assert jnp.allclose(out, ref, atol=1e-5, rtol=1e-5), (out, ref)

    # bf16 matmul-operand path (recommended for v6e/v7x): f32 accumulation,
    # looser tolerance vs the f32 reference.
    out_bf16 = ncf_forward(user_input, item_input, params,
                           compute_dtype=jnp.bfloat16)
    out_bf16 = jax.block_until_ready(out_bf16)
    assert out_bf16.shape == (batch, 1)
    assert jnp.allclose(out_bf16, ref, atol=5e-2), (out_bf16, ref)

    print("KERNEL_OK")
</pallas_src>

<mosaic_0001>
module attributes {stable_mosaic.version = 11 : i64} {
  func.func @kernel(%arg0: i32, %arg1: memref<8x16xf32, #tpu.memory_space<vmem>>, %arg2: memref<8x16xf32, #tpu.memory_space<vmem>>, %arg3: memref<8x32xf32, #tpu.memory_space<vmem>>, %arg4: memref<32x16xf32, #tpu.memory_space<vmem>>, %arg5: memref<1x16xf32, #tpu.memory_space<vmem>>, %arg6: memref<16x8xf32, #tpu.memory_space<vmem>>, %arg7: memref<1x8xf32, #tpu.memory_space<vmem>>, %arg8: memref<1x16xf32, #tpu.memory_space<vmem>>, %arg9: memref<1x8xf32, #tpu.memory_space<vmem>>, %arg10: memref<1x1xf32, #tpu.memory_space<vmem>>, %arg11: memref<8x1xf32, #tpu.memory_space<vmem>>) attributes {dimension_semantics = [#tpu.dimension_semantics<parallel>], iteration_bounds = array<i64: 1>, scalar_prefetch = 0 : i64, scratch_operands = 0 : i64, tpu.core_type = #tpu.core_type<tc>, window_params = [{transform_indices = @transform_0, window_bounds = array<i64: 8, 16>}, {transform_indices = @transform_1, window_bounds = array<i64: 8, 16>}, {transform_indices = @transform_2, window_bounds = array<i64: 8, 32>}, {pipeline_mode = #tpu.pipeline_mode<synchronous>, transform_indices = @transform_3, window_bounds = array<i64: 32, 16>}, {pipeline_mode = #tpu.pipeline_mode<synchronous>, transform_indices = @transform_4, window_bounds = array<i64: 1, 16>}, {pipeline_mode = #tpu.pipeline_mode<synchronous>, transform_indices = @transform_5, window_bounds = array<i64: 16, 8>}, {pipeline_mode = #tpu.pipeline_mode<synchronous>, transform_indices = @transform_6, window_bounds = array<i64: 1, 8>}, {pipeline_mode = #tpu.pipeline_mode<synchronous>, transform_indices = @transform_7, window_bounds = array<i64: 1, 16>}, {pipeline_mode = #tpu.pipeline_mode<synchronous>, transform_indices = @transform_8, window_bounds = array<i64: 1, 8>}, {pipeline_mode = #tpu.pipeline_mode<synchronous>, transform_indices = @transform_9, window_bounds = array<i64: 1, 1>}, {transform_indices = @transform_10, window_bounds = array<i64: 8, 1>}]} {
    %c0 = arith.constant 0 : index
    %c0_0 = arith.constant 0 : index
    %0 = vector.load %arg1[%c0, %c0_0] : memref<8x16xf32, #tpu.memory_space<vmem>>, vector<8x16xf32>
    %c0_1 = arith.constant 0 : index
    %c0_2 = arith.constant 0 : index
    %1 = vector.load %arg2[%c0_1, %c0_2] : memref<8x16xf32, #tpu.memory_space<vmem>>, vector<8x16xf32>
    %2 = arith.mulf %0, %1 : vector<8x16xf32>
    %c0_3 = arith.constant 0 : index
    %c0_4 = arith.constant 0 : index
    %3 = vector.load %arg3[%c0_3, %c0_4] : memref<8x32xf32, #tpu.memory_space<vmem>>, vector<8x32xf32>
    %c0_5 = arith.constant 0 : index
    %c0_6 = arith.constant 0 : index
    %4 = vector.load %arg4[%c0_5, %c0_6] : memref<32x16xf32, #tpu.memory_space<vmem>>, vector<32x16xf32>
    %cst = arith.constant dense<0.000000e+00> : vector<8x16xf32>
    %5 = tpu.matmul %3, %4, %cst {dimension_numbers = #tpu.dot_dimension_numbers<[1], [0], [0], [1], [0, 0, 1, 1], [], []>} : vector<8x32xf32>, vector<32x16xf32>, vector<8x16xf32> -> vector<8x16xf32>
    %c0_7 = arith.constant 0 : index
    %c0_8 = arith.constant 0 : index
    %6 = vector.load %arg5[%c0_7, %c0_8] : memref<1x16xf32, #tpu.memory_space<vmem>>, vector<1x16xf32>
    %7 = vector.broadcast %6 : vector<1x16xf32> to vector<8x16xf32>
    %8 = arith.addf %5, %7 : vector<8x16xf32>
    %cst_9 = arith.constant 0.000000e+00 : f32
    %9 = vector.broadcast %cst_9 : f32 to vector<8x16xf32>
    %10 = arith.maximumf %8, %9 : vector<8x16xf32>
    %c0_10 = arith.constant 0 : index
    %c0_11 = arith.constant 0 : index
    %11 = vector.load %arg6[%c0_10, %c0_11] : memref<16x8xf32, #tpu.memory_space<vmem>>, vector<16x8xf32>
    %cst_12 = arith.constant dense<0.000000e+00> : vector<8x8xf32>
    %12 = tpu.matmul %10, %11, %cst_12 {dimension_numbers = #tpu.dot_dimension_numbers<[1], [0], [0], [1], [0, 0, 1, 1], [], []>} : vector<8x16xf32>, vector<16x8xf32>, vector<8x8xf32> -> vector<8x8xf32>
    %c0_13 = arith.constant 0 : index
    %c0_14 = arith.constant 0 : index
    %13 = vector.load %arg7[%c0_13, %c0_14] : memref<1x8xf32, #tpu.memory_space<vmem>>, vector<1x8xf32>
    %14 = vector.broadcast %13 : vector<1x8xf32> to vector<8x8xf32>
    %15 = arith.addf %12, %14 : vector<8x8xf32>
    %cst_15 = arith.constant 0.000000e+00 : f32
    %16 = vector.broadcast %cst_15 : f32 to vector<8x8xf32>
    %17 = arith.maximumf %15, %16 : vector<8x8xf32>
    %c0_16 = arith.constant 0 : index
    %c0_17 = arith.constant 0 : index
    %18 = vector.load %arg8[%c0_16, %c0_17] : memref<1x16xf32, #tpu.memory_space<vmem>>, vector<1x16xf32>
    %19 = vector.broadcast %18 : vector<1x16xf32> to vector<8x16xf32>
    %20 = arith.mulf %2, %19 : vector<8x16xf32>
    %cst_18 = arith.constant dense<0.000000e+00> : vector<8xf32>
    %21 = vector.multi_reduction <add>, %20, %cst_18 [1] : vector<8x16xf32> to vector<8xf32>
    %22 = vector.shape_cast %21 : vector<8xf32> to vector<8x1xf32>
    %c0_19 = arith.constant 0 : index
    %c0_20 = arith.constant 0 : index
    %23 = vector.load %arg9[%c0_19, %c0_20] : memref<1x8xf32, #tpu.memory_space<vmem>>, vector<1x8xf32>
    %24 = vector.broadcast %23 : vector<1x8xf32> to vector<8x8xf32>
    %25 = arith.mulf %17, %24 : vector<8x8xf32>
    %cst_21 = arith.constant dense<0.000000e+00> : vector<8xf32>
    %26 = vector.multi_reduction <add>, %25, %cst_21 [1] : vector<8x8xf32> to vector<8xf32>
    %27 = vector.shape_cast %26 : vector<8xf32> to vector<8x1xf32>
    %28 = arith.addf %22, %27 : vector<8x1xf32>
    %c0_22 = arith.constant 0 : index
    %c0_23 = arith.constant 0 : index
    %29 = vector.load %arg10[%c0_22, %c0_23] : memref<1x1xf32, #tpu.memory_space<vmem>>, vector<1x1xf32>
    %30 = vector.broadcast %29 : vector<1x1xf32> to vector<8x1xf32>
    %31 = arith.addf %28, %30 : vector<8x1xf32>
    %32 = arith.negf %31 : vector<8x1xf32>
    %33 = math.exp %32 : vector<8x1xf32>
    %cst_24 = arith.constant 1.000000e+00 : f32
    %34 = vector.broadcast %cst_24 : f32 to vector<8x1xf32>
    %35 = arith.addf %34, %33 : vector<8x1xf32>
    %36 = arith.divf %34, %35 : vector<8x1xf32>
    %c0_25 = arith.constant 0 : index
    %c0_26 = arith.constant 0 : index
    %37 = vector.load %arg11[%c0_25, %c0_26] : memref<8x1xf32, #tpu.memory_space<vmem>>, vector<8x1xf32>
    tpu.vector_store %arg11[%c0_25, %c0_26], %36 {strides = array<i32>} : memref<8x1xf32, #tpu.memory_space<vmem>>, vector<8x1xf32>,
    return
  }
  func.func @transform_0(%arg0: i32) -> (i32, i32) {
    %c0_i32 = arith.constant 0 : i32
    %c0_i32_0 = arith.constant 0 : i32
    return %arg0, %c0_i32 : i32, i32
  }
  func.func @transform_1(%arg0: i32) -> (i32, i32) {
    %c0_i32 = arith.constant 0 : i32
    %c0_i32_0 = arith.constant 0 : i32
    return %arg0, %c0_i32 : i32, i32
  }
  func.func @transform_2(%arg0: i32) -> (i32, i32) {
    %c0_i32 = arith.constant 0 : i32
    %c0_i32_0 = arith.constant 0 : i32
    return %arg0, %c0_i32 : i32, i32
  }
  func.func @transform_3(%arg0: i32) -> (i32, i32) {
    %c0_i32 = arith.constant 0 : i32
    %c0_i32_0 = arith.constant 0 : i32
    %c0_i32_1 = arith.constant 0 : i32
    return %c0_i32, %c0_i32_0 : i32, i32
  }
  func.func @transform_4(%arg0: i32) -> (i32, i32) {
    %c0_i32 = arith.constant 0 : i32
    %c0_i32_0 = arith.constant 0 : i32
    %c0_i32_1 = arith.constant 0 : i32
    return %c0_i32, %c0_i32_0 : i32, i32
  }
  func.func @transform_5(%arg0: i32) -> (i32, i32) {
    %c0_i32 = arith.constant 0 : i32
    %c0_i32_0 = arith.constant 0 : i32
    %c0_i32_1 = arith.constant 0 : i32
    return %c0_i32, %c0_i32_0 : i32, i32
  }
  func.func @transform_6(%arg0: i32) -> (i32, i32) {
    %c0_i32 = arith.constant 0 : i32
    %c0_i32_0 = arith.constant 0 : i32
    %c0_i32_1 = arith.constant 0 : i32
    return %c0_i32, %c0_i32_0 : i32, i32
  }
  func.func @transform_7(%arg0: i32) -> (i32, i32) {
    %c0_i32 = arith.constant 0 : i32
    %c0_i32_0 = arith.constant 0 : i32
    %c0_i32_1 = arith.constant 0 : i32
    return %c0_i32, %c0_i32_0 : i32, i32
  }
  func.func @transform_8(%arg0: i32) -> (i32, i32) {
    %c0_i32 = arith.constant 0 : i32
    %c0_i32_0 = arith.constant 0 : i32
    %c0_i32_1 = arith.constant 0 : i32
    return %c0_i32, %c0_i32_0 : i32, i32
  }
  func.func @transform_9(%arg0: i32) -> (i32, i32) {
    %c0_i32 = arith.constant 0 : i32
    %c0_i32_0 = arith.constant 0 : i32
    %c0_i32_1 = arith.constant 0 : i32
    return %c0_i32, %c0_i32_0 : i32, i32
  }
  func.func @transform_10(%arg0: i32) -> (i32, i32) {
    %c0_i32 = arith.constant 0 : i32
    %c0_i32_0 = arith.constant 0 : i32
    return %arg0, %c0_i32 : i32, i32
  }
}

</mosaic_0001>

<llo_original>
// kernel: ncf_forward.1
$region0: #{ncf_forward.1}
  #allocation0 [shape = 'u32[]', space=smem, size = 0x4, offset = 0x4, fixed_abs, tag = 'smem constant byte address 0x4 - core index']
  #allocation1 [shape = 'u32[144,128]{1,0:T(1,128)}', space=vmem, size = 0x12000, scoped, tag = 'internal scratch']
  #allocation2 [shape = 'f32[1,1]{1,0:T(1,128)S(1)}', space=vmem, size = 0x200, scoped, tag = 'scoped memory for ncf_forward.1']
  %s0 = inlined_call_operand.vmem [shape: f32[8,16], index: 0, kind: input, shape index: {}]
  %s1 = inlined_call_operand.vmem [shape: f32[8,16], index: 1, kind: input, shape index: {}]
  %s2 = inlined_call_operand.vmem [shape: f32[8,32], index: 2, kind: input, shape index: {}]
  %s3 = inlined_call_operand.vmem [shape: f32[32,16], index: 3, kind: input, shape index: {}]
  %s4 = inlined_call_operand.vmem [shape: f32[1,16], index: 4, kind: input, shape index: {}]
  %s5 = inlined_call_operand.vmem [shape: f32[16,8], index: 5, kind: input, shape index: {}]
  %s6 = inlined_call_operand.vmem [shape: f32[1,8], index: 6, kind: input, shape index: {}]
  %s7 = inlined_call_operand.vmem [shape: f32[1,16], index: 7, kind: input, shape index: {}]
  %s8 = inlined_call_operand.vmem [shape: f32[1,8], index: 8, kind: input, shape index: {}]
  %s9 = inlined_call_operand.<no memory space> [shape: f32[1,1], index: 9, kind: input, shape index: {}]
  %s10 = inlined_call_operand.vmem [shape: f32[8,1], index: 10, kind: output, shape index: {}]
  %s11 = sld [smem:[#allocation0]]
  $region50: #{ncf_forward.1} parent=0
    _
  %s13 = ssub.s32 1, %s11
  %s14 = scalar_select 0, %s13, %s11
  %v15 = vstv %s9
  %16 = vst [vmem:[#allocation2] sm:$0x1] %v15
  // Predicated region
  $region2: #{ncf_forward.1} parent=0 // pred_check
    _
  $region3: #{ncf_forward.1} parent=0 // pred_check_branch
    %18 = sbr.rel (0) target = $region5
  $region4: #{ncf_forward.1} parent=0 // pred_region
    _
  $region5: #{ncf_forward.1} parent=0 // pred_fallthru
    _
  // Predicated region
  $region6: #{ncf_forward.1} parent=0 // pred_check
    _
  $region7: #{ncf_forward.1} parent=0 // pred_check_branch
    %20 = sbr.rel (0) target = $region9
  $region8: #{ncf_forward.1} parent=0 // pred_region
    _
  $region9: #{ncf_forward.1} parent=0 // pred_fallthru
    _
  // Predicated region
  $region10: #{ncf_forward.1} parent=0 // pred_check
    _
  $region11: #{ncf_forward.1} parent=0 // pred_check_branch
    %22 = sbr.rel (0) target = $region13
  $region12: #{ncf_forward.1} parent=0 // pred_region
    _
  $region13: #{ncf_forward.1} parent=0 // pred_fallthru
    _
  // Predicated region
  $region14: #{ncf_forward.1} parent=0 // pred_check
    _
  $region15: #{ncf_forward.1} parent=0 // pred_check_branch
    %24 = sbr.rel (0) target = $region17
  $region16: #{ncf_forward.1} parent=0 // pred_region
    _
  $region17: #{ncf_forward.1} parent=0 // pred_fallthru
    _
  // Predicated region
  $region18: #{ncf_forward.1} parent=0 // pred_check
    _
  $region19: #{ncf_forward.1} parent=0 // pred_check_branch
    %26 = sbr.rel (0) target = $region21
  $region20: #{ncf_forward.1} parent=0 // pred_region
    _
  $region21: #{ncf_forward.1} parent=0 // pred_fallthru
    _
  // Predicated region
  $region22: #{ncf_forward.1} parent=0 // pred_check
    _
  $region23: #{ncf_forward.1} parent=0 // pred_check_branch
    %28 = sbr.rel (0) target = $region25
  $region24: #{ncf_forward.1} parent=0 // pred_region
    _
  $region25: #{ncf_forward.1} parent=0 // pred_fallthru
    _
  // Predicated region
  $region26: #{ncf_forward.1} parent=0 // pred_check
    _
  $region27: #{ncf_forward.1} parent=0 // pred_check_branch
    %30 = sbr.rel (0) target = $region29
  $region28: #{ncf_forward.1} parent=0 // pred_region
    _
  $region29: #{ncf_forward.1} parent=0 // pred_fallthru
    _
  // Predicated region
  $region30: #{ncf_forward.1} parent=0 // pred_check
    _
  $region31: #{ncf_forward.1} parent=0 // pred_check_branch
    %32 = sbr.rel (0) target = $region33
  $region32: #{ncf_forward.1} parent=0 // pred_region
    _
  $region33: #{ncf_forward.1} parent=0 // pred_fallthru
    _
  // Predicated region
  $region34: #{ncf_forward.1} parent=0 // pred_check
    _
  $region35: #{ncf_forward.1} parent=0 // pred_check_branch
    %34 = sbr.rel (0) target = $region37
  $region36: #{ncf_forward.1} parent=0 // pred_region
    _
  $region37: #{ncf_forward.1} parent=0 // pred_fallthru
    _
  // Predicated region
  $region38: #{ncf_forward.1} parent=0 // pred_check
    _
  $region39: #{ncf_forward.1} parent=0 // pred_check_branch
    %36 = sbr.rel (0) target = $region41
  $region40: #{ncf_forward.1} parent=0 // pred_region
    _
  $region41: #{ncf_forward.1} parent=0 // pred_fallthru
    _
  %v37 = vld [vmem:[%s0] sm:$0xff]
  %v38 = vld [vmem:[%s1] sm:$0xff]
  %v39 = vmul.f32 %v37, %v38
  %v40 = vld [vmem:[%s2] sm:$0xff]
  %v41 = vld [vmem:[%s3] sm:$0xff]
  %v42 = vld [vmem:[%s3 + $0x8] sm:$0xff]
  %v43 = vld [vmem:[%s3 + $0x10] sm:$0xff]
  %v44 = vld [vmem:[%s3 + $0x18] sm:$0xff]
  %v45 = vld [vmem:[%s4] sm:$0x1]
  %v47 = vlaneseq
  %v48 = vshrl.u32 %v47, 7
  %v49 = vsub.s32 0, %v48
  %v50 = vrot.slane %v45, %v49
  %vm52 = vcmask 261120
  %v54 = vsel %vm52, %v40, 0
  %56 = vmatprep.subr.mxu0 0.0
  %57 = vmatpush1.msra.mxu0 0.0
  %58 = vmatprep.subr.mxu0 0.0
  %59 = vmatpush1.msra.mxu0 0.0
  %60 = vmatprep.subr.mxu0 0.0
  %61 = vmatpush1.msra.mxu0 0.0
  %62 = vmatprep.subr.mxu0 0.0
  %63 = vmatpush1.msra.mxu0 0.0
  %64 = vmatprep.subr.mxu0 0.0
  %65 = vmatpush1.msra.mxu0 0.0
  %66 = vmatprep.subr.mxu0 0.0
  %67 = vmatpush1.msra.mxu0 0.0
  %68 = vmatprep.subr.mxu0 0.0
  %69 = vmatpush1.msra.mxu0 0.0
  %70 = vmatprep.subr.mxu0 0.0
  %71 = vmatpush1.msra.mxu0 0.0
  %72 = vmatprep.subr.mxu0 0.0
  %73 = vmatpush1.msra.mxu0 0.0
  %74 = vmatprep.subr.mxu0 0.0
  %75 = vmatpush1.msra.mxu0 0.0
  %76 = vmatprep.subr.mxu0 0.0
  %77 = vmatpush1.msra.mxu0 0.0
  %78 = vmatprep.subr.mxu0 0.0
  %79 = vmatpush1.msra.mxu0 0.0
  %80 = vmatprep.subr.mxu0 0.0
  %81 = vmatpush1.msra.mxu0 %v44
  %82 = vmatprep.subr.mxu0 0.0
  %83 = vmatpush1.msra.mxu0 %v43
  %84 = vmatprep.subr.mxu0 0.0
  %85 = vmatpush1.msra.mxu0 %v42
  %86 = vmatprep.subr.mxu0 0.0
  %87 = vmatpush1.msra.mxu0 %v41
  %88 = vmatprep.subr.mxu0 0.0
  %89 = vmatpush2.msra.mxu0 0.0
  %90 = vmatprep.subr.mxu0 0.0
  %91 = vmatpush2.msra.mxu0 0.0
  %92 = vmatprep.subr.mxu0 0.0
  %93 = vmatpush2.msra.mxu0 0.0
  %94 = vmatprep.subr.mxu0 0.0
  %95 = vmatpush2.msra.mxu0 0.0
  %96 = vmatprep.subr.mxu0 0.0
  %97 = vmatpush2.msra.mxu0 0.0
  %98 = vmatprep.subr.mxu0 0.0
  %99 = vmatpush2.msra.mxu0 0.0
  %100 = vmatprep.subr.mxu0 0.0
  %101 = vmatpush2.msra.mxu0 0.0
  %102 = vmatprep.subr.mxu0 0.0
  %103 = vmatpush2.msra.mxu0 0.0
  %104 = vmatprep.subr.mxu0 0.0
  %105 = vmatpush2.msra.mxu0 0.0
  %106 = vmatprep.subr.mxu0 0.0
  %107 = vmatpush2.msra.mxu0 0.0
  %108 = vmatprep.subr.mxu0 0.0
  %109 = vmatpush2.msra.mxu0 0.0
  %110 = vmatprep.subr.mxu0 0.0
  %111 = vmatpush2.msra.mxu0 0.0
  %112 = vmatprep.subr.mxu0 0.0
  %113 = vmatpush2.msra.mxu0 0.0
  %114 = vmatprep.subr.mxu0 0.0
  %115 = vmatpush2.msra.mxu0 0.0
  %116 = vmatprep.subr.mxu0 0.0
  %117 = vmatpush2.msra.mxu0 0.0
  %118 = vmatprep.subr.mxu0 0.0
  %119 = vmatpush2.msra.mxu0 0.0
  %120 = vmatprep.mubr.f32.mxu0 0.0
  %121 = vmatmul.mubr.f32.gmra.mxu0 %v54
  %v122 = vpop.f32.mrf.mxu0
  %v123 = vadd.f32 %v50, %v122
  %v124 = vpop.f32.mrf.mxu0
  %125 = vdwg.mxu0
  %v126 = vmax.f32 %v123, 0.0
  %v127 = vld [vmem:[%s5] sm:$0xff]
  %v128 = vld [vmem:[%s5 + $0x8] sm:$0xff]
  %v129 = vld [vmem:[%s6] sm:$0x1]
  %v131 = vlaneseq
  %v132 = vshrl.u32 %v131, 7
  %v133 = vsub.s32 0, %v132
  %v134 = vrot.slane %v129, %v133
  %vm136 = vcmask 130048
  %v138 = vsel %vm136, %v126, 0
  %140 = vmatprep.subr.mxu0 0.0
  %141 = vmatpush1.msra.mxu0 0.0
  %142 = vmatprep.subr.mxu0 0.0
  %143 = vmatpush1.msra.mxu0 0.0
  %144 = vmatprep.subr.mxu0 0.0
  %145 = vmatpush1.msra.mxu0 0.0
  %146 = vmatprep.subr.mxu0 0.0
  %147 = vmatpush1.msra.mxu0 0.0
  %148 = vmatprep.subr.mxu0 0.0
  %149 = vmatpush1.msra.mxu0 0.0
  %150 = vmatprep.subr.mxu0 0.0
  %151 = vmatpush1.msra.mxu0 0.0
  %152 = vmatprep.subr.mxu0 0.0
  %153 = vmatpush1.msra.mxu0 0.0
  %154 = vmatprep.subr.mxu0 0.0
  %155 = vmatpush1.msra.mxu0 0.0
  %156 = vmatprep.subr.mxu0 0.0
  %157 = vmatpush1.msra.mxu0 0.0
  %158 = vmatprep.subr.mxu0 0.0
  %159 = vmatpush1.msra.mxu0 0.0
  %160 = vmatprep.subr.mxu0 0.0
  %161 = vmatpush1.msra.mxu0 0.0
  %162 = vmatprep.subr.mxu0 0.0
  %163 = vmatpush1.msra.mxu0 0.0
  %164 = vmatprep.subr.mxu0 0.0
  %165 = vmatpush1.msra.mxu0 0.0
  %166 = vmatprep.subr.mxu0 0.0
  %167 = vmatpush1.msra.mxu0 0.0
  %168 = vmatprep.subr.mxu0 0.0
  %169 = vmatpush1.msra.mxu0 %v128
  %170 = vmatprep.subr.mxu0 0.0
  %171 = vmatpush1.msra.mxu0 %v127
  %172 = vmatprep.subr.mxu0 0.0
  %173 = vmatpush2.msra.mxu0 0.0
  %174 = vmatprep.subr.mxu0 0.0
  %175 = vmatpush2.msra.mxu0 0.0
  %176 = vmatprep.subr.mxu0 0.0
  %177 = vmatpush2.msra.mxu0 0.0
  %178 = vmatprep.subr.mxu0 0.0
  %179 = vmatpush2.msra.mxu0 0.0
  %180 = vmatprep.subr.mxu0 0.0
  %181 = vmatpush2.msra.mxu0 0.0
  %182 = vmatprep.subr.mxu0 0.0
  %183 = vmatpush2.msra.mxu0 0.0
  %184 = vmatprep.subr.mxu0 0.0
  %185 = vmatpush2.msra.mxu0 0.0
  %186 = vmatprep.subr.mxu0 0.0
  %187 = vmatpush2.msra.mxu0 0.0
  %188 = vmatprep.subr.mxu0 0.0
  %189 = vmatpush2.msra.mxu0 0.0
  %190 = vmatprep.subr.mxu0 0.0
  %191 = vmatpush2.msra.mxu0 0.0
  %192 = vmatprep.subr.mxu0 0.0
  %193 = vmatpush2.msra.mxu0 0.0
  %194 = vmatprep.subr.mxu0 0.0
  %195 = vmatpush2.msra.mxu0 0.0
  %196 = vmatprep.subr.mxu0 0.0
  %197 = vmatpush2.msra.mxu0 0.0
  %198 = vmatprep.subr.mxu0 0.0
  %199 = vmatpush2.msra.mxu0 0.0
  %200 = vmatprep.subr.mxu0 0.0
  %201 = vmatpush2.msra.mxu0 0.0
  %202 = vmatprep.subr.mxu0 0.0
  %203 = vmatpush2.msra.mxu0 0.0
  %204 = vmatprep.mubr.f32.mxu0 0.0
  %205 = vmatmul.mubr.f32.gmra.mxu0 %v138
  %v206 = vpop.f32.mrf.mxu0
  %v207 = vadd.f32 %v134, %v206
  %v208 = vpop.f32.mrf.mxu0
  %209 = vdwg.mxu0
  %v210 = vmax.f32 %v207, 0.0
  %v211 = vld [vmem:[%s7] sm:$0x1]
  %v213 = vlaneseq
  %v214 = vshrl.u32 %v213, 7
  %v215 = vsub.s32 0, %v214
  %v216 = vrot.slane %v211, %v215
  %v218 = vmul.f32 %v39, %v216
  %v219 = vsel %vm136, %v218, 0.0
  %220 = vadd.xlane.f32.xlu0 %v219
  %v221 = vpop.xlane.xlu0 %220
  %v222 = vld [vmem:[%s8] sm:$0x1]
  %v224 = vlaneseq
  %v225 = vshrl.u32 %v224, 7
  %v226 = vsub.s32 0, %v225
  %v227 = vrot.slane %v222, %v226
  %v229 = vmul.f32 %v210, %v227
  %vm230 = vcmask 64512
  %v231 = vsel %vm230, %v229, 0.0
  %232 = vadd.xlane.f32.xlu0 %v231
  %v233 = vpop.xlane.xlu0 %232
  %v234 = vadd.f32 %v221, %v233
  %v235 = vld [vmem:[#allocation2] sm:$0x1]
  %v237 = vlaneseq
  %v238 = vshrl.u32 %v237, 7
  %v239 = vsub.s32 0, %v238
  %v240 = vrot.slane %v235, %v239
  %v242 = vadd.f32 %v234, %v240
  %v243 = vxor.u32 %v242, 2147483648
  %v244 = vmul.f32 %v243, 1.442695
  %v245 = vpow.pop %v244
  %v246 = vadd.f32 %v245, 1.0
  %v247 = vrcp.pop %v246
  %v248 = vmul.f32 1.0, %v247
  %vm249 = vcmask 7168
  %250 = vst.msk [vmem:[%s10] sm:$0xff] %vm249, %v248
  // Predicated region
  $region42: #{ncf_forward.1} parent=0 // pred_check
    _
  $region43: #{ncf_forward.1} parent=0 // pred_check_branch
    %252 = sbr.rel (0) target = $region45
  $region44: #{ncf_forward.1} parent=0 // pred_region
    _
  $region45: #{ncf_forward.1} parent=0 // pred_fallthru
    _
  // Predicated region
  $region46: #{ncf_forward.1} parent=0 // pred_check
    _
  $region47: #{ncf_forward.1} parent=0 // pred_check_branch
    %254 = sbr.rel (0) target = $region49
  $region48: #{ncf_forward.1} parent=0 // pred_region
    _
  $region49: #{ncf_forward.1} parent=0 // pred_fallthru
    _

</llo_original>
